<compile_context>
chip_gen: v7x
topology: tpu7x:2x2x1
jax: 0.10.0
libtpu: 0.0.40
codegen_flags: <defaults>
</compile_context>

<pallas_src>
import jax
import jax.numpy as jnp
from jax import lax
from jax.experimental import pallas as pl
from jax.experimental.pallas import tpu as pltpu

_LANE = 128
_SUB = 8
_B = 3                                   # thresholds per HBM streaming pass  (2 bits / pass)
_K_HBM = 1024                            # column width of the HBM-path 2-D view
_TR_HBM = 1024                           # rows per HBM-path block -> 1024*1024*4 = 4 MiB blocks
_VMEM_PATH_MAX_ELEMS = 1 << 20           # <= 4 MiB f32 -> single-call VMEM-resident path
_VMEM_LIMIT_BYTES = 32 * 1024 * 1024     # safe on v5e/v6e (128 MiB) and v7x (64 MiB physical)


# --------------------------------------------------------------------------------------------
# VMEM-resident fast path: one kernel computes min(x) and the whole 31-step bisection.
# --------------------------------------------------------------------------------------------
def _build_vmem_call(R, K):
    def kernel(k_ref, x_ref, min_ref, kth_ref, u_ref):
        # Global min (padding is +inf -> neutral).
        min_ref[0, 0] = jnp.min(x_ref[...])
        # |x| bit pattern, resident in VMEM for the whole bisection (loaded from HBM once).
        u_ref[...] = pltpu.bitcast(jnp.abs(x_ref[...]), jnp.int32)
        kk = k_ref[0]

        def body(it, p):
            bit = jnp.int32(30) - it
            one = jnp.int32(1)
            probe = jnp.bitwise_or(p, jnp.left_shift(one, bit) - one)
            cnt = jnp.sum((u_ref[...] <= probe).astype(jnp.int32))
            return jnp.where(cnt >= kk, p, jnp.bitwise_or(p, jnp.left_shift(one, bit)))

        kth_ref[0, 0] = lax.fori_loop(0, 31, body, jnp.int32(0))

    return pl.pallas_call(
        kernel,
        out_shape=(jax.ShapeDtypeStruct((1, 1), jnp.float32),    # min(x)
                   jax.ShapeDtypeStruct((1, 1), jnp.int32)),     # bit pattern of kth |x|
        grid_spec=pltpu.PrefetchScalarGridSpec(
            num_scalar_prefetch=1,
            grid=(1,),
            in_specs=[pl.BlockSpec((R, K), lambda i, s: (0, 0))],
            out_specs=(pl.BlockSpec(memory_space=pltpu.MemorySpace.SMEM),
                       pl.BlockSpec(memory_space=pltpu.MemorySpace.SMEM)),
            scratch_shapes=[pltpu.VMEM((R, K), jnp.int32)],
        ),
        compiler_params=pltpu.CompilerParams(
            dimension_semantics=("arbitrary",),
            vmem_limit_bytes=_VMEM_LIMIT_BYTES,
        ),
    )


# --------------------------------------------------------------------------------------------
# HBM streaming path: count(|x| <= t_b) for B thresholds per pass (min fused into first pass).
# --------------------------------------------------------------------------------------------
def _build_count_call(R, K, TR, B, with_min):
    nrb = R // TR
    nslab = TR // _SUB
    ncol = K // _LANE

    def kernel(*refs):
        if with_min:
            t_ref, x_ref, cnt_ref, min_ref = refs
        else:
            t_ref, x_ref, cnt_ref = refs
        thr = [t_ref[b] for b in range(B)]                       # SMEM scalar loads, hoisted

        def slab_body(r, carry):
            accs = carry[:B]
            row0 = pl.multiple_of(r * _SUB, _SUB)
            slab = x_ref[pl.ds(row0, _SUB), :]                   # (8, K) f32
            u = pltpu.bitcast(jnp.abs(slab), jnp.int32)          # |x| bit pattern (sign clear)
            new = []
            for b in range(B):
                le = u <= thr[b]
                folded = le[:, 0:_LANE].astype(jnp.int32)
                for c in range(1, ncol):                         # fold 128-lane chunks
                    folded = folded + le[:, c * _LANE:(c + 1) * _LANE].astype(jnp.int32)
                new.append(accs[b] + folded)
            if with_min:
                m = slab[:, 0:_LANE]
                for c in range(1, ncol):
                    m = jnp.minimum(m, slab[:, c * _LANE:(c + 1) * _LANE])
                new.append(jnp.minimum(carry[B], m))
            return tuple(new)

        init = tuple(jnp.zeros((_SUB, _LANE), jnp.int32) for _ in range(B))
        if with_min:
            init = init + (jnp.full((_SUB, _LANE), jnp.inf, jnp.float32),)
        out = lax.fori_loop(0, nslab, slab_body, init)
        for b in range(B):
            cnt_ref[:, b * _LANE:(b + 1) * _LANE] = out[b]
        if with_min:
            min_ref[...] = out[B]

    if with_min:
        out_shape = (jax.ShapeDtypeStruct((nrb * _SUB, B * _LANE), jnp.int32),
                     jax.ShapeDtypeStruct((nrb * _SUB, _LANE), jnp.float32))
        out_specs = (pl.BlockSpec((_SUB, B * _LANE), lambda i, s: (i, 0)),
                     pl.BlockSpec((_SUB, _LANE), lambda i, s: (i, 0)))
    else:
        out_shape = jax.ShapeDtypeStruct((nrb * _SUB, B * _LANE), jnp.int32)
        out_specs = pl.BlockSpec((_SUB, B * _LANE), lambda i, s: (i, 0))

    return pl.pallas_call(
        kernel,
        out_shape=out_shape,
        grid_spec=pltpu.PrefetchScalarGridSpec(
            num_scalar_prefetch=1,
            grid=(nrb,),
            in_specs=[pl.BlockSpec((TR, K), lambda i, s: (i, 0))],
            out_specs=out_specs,
        ),
        compiler_params=pltpu.CompilerParams(
            dimension_semantics=("parallel",),
            vmem_limit_bytes=_VMEM_LIMIT_BYTES,
        ),
    )


def _hbm_min_and_kth(x2, k, R, K):
    """min(x) and exact k-th smallest |x| via 16 multi-threshold streaming passes."""
    B = _B
    nrb = R // _TR_HBM
    first_call = _build_count_call(R, K, _TR_HBM, B, with_min=True)
    count_call = _build_count_call(R, K, _TR_HBM, B, with_min=False)

    ms = jnp.arange(B, dtype=jnp.int32)

    def thresholds(p, shift, nthr):
        m_eff = jnp.minimum(ms, nthr - 1)                        # clamp unused threshold slots
        low = jnp.left_shift(jnp.int32(1), shift) - jnp.int32(1)
        return jnp.bitwise_or(jnp.bitwise_or(p, jnp.left_shift(m_eff, shift)), low)

    def reduce_counts(parts):                                    # (nrb*8, B*128) -> (B,)
        return parts.reshape(nrb * _SUB, B, _LANE).sum(axis=(0, 2))

    def update(p, cnts, shift, nthr):
        v = jnp.sum((cnts[:nthr] < k).astype(jnp.int32))         # next nthr-ary digit
        return jnp.bitwise_or(p, jnp.left_shift(v, shift))

    # Pass 0: bits 30..29, min fused.
    shift0 = jnp.int32(29)
    cnt_parts, min_parts = first_call(thresholds(jnp.int32(0), shift0, B), x2)
    min_val = jnp.min(min_parts)
    p = update(jnp.int32(0), reduce_counts(cnt_parts), shift0, B)

    # Passes 1..14: bits 28..1, two bits per streaming pass.
    def body(i, p):
        shift = jnp.int32(29) - 2 * i
        cnts = reduce_counts(count_call(thresholds(p, shift, B), x2))
        return update(p, cnts, shift, B)

    p = lax.fori_loop(1, 15, body, p)

    # Final pass: bit 0 (single effective threshold).
    cnts = reduce_counts(count_call(thresholds(p, jnp.int32(0), 1), x2))
    p = update(p, cnts, jnp.int32(0), 1)

    return min_val, lax.bitcast_convert_type(p, jnp.float32)


# --------------------------------------------------------------------------------------------
# Wrapper: geometry selection, padding, path dispatch.
# --------------------------------------------------------------------------------------------
@jax.jit
def _min_and_kth_abs(x, k):
    """Returns (min(x), k-th smallest of |x|) as float32 scalars; k is a traced int (1-indexed)."""
    xf = jnp.ravel(x).astype(jnp.float32)
    n = xf.shape[0]
    kk = jnp.asarray(k, jnp.int32)

    if n <= _VMEM_PATH_MAX_ELEMS:
        tiles = -(-n // (_SUB * _LANE))
        R, K = _SUB * tiles, _LANE
    else:
        K = _K_HBM
        rows = -(-n // K)
        R = -(-rows // _TR_HBM) * _TR_HBM

    n_pad = R * K                                                # assumes n_pad < 2**31
    if n_pad != n:
        # +inf padding: neutral for min and provably neutral for the bisection (finite inputs).
        xf = jnp.concatenate([xf, jnp.full((n_pad - n,), jnp.inf, jnp.float32)])
    x2 = xf.reshape(R, K)

    if n <= _VMEM_PATH_MAX_ELEMS:
        min_out, kth_bits = _build_vmem_call(R, K)(jnp.reshape(kk, (1,)), x2)
        return min_out[0, 0], lax.bitcast_convert_type(kth_bits[0, 0], jnp.float32)
    return _hbm_min_and_kth(x2, kk, R, K)


class HistogramObserver:
    """JAX/Pallas port of the PyTorch HistogramObserver (percentile-of-|x| + min observer)."""

    def __init__(self, out_channels, level, momentum=0.1, percentile=0.9999):
        self.momentum = momentum
        self.percentile = percentile
        self.num_flag = 0
        self.level = level
        self.out_channels = out_channels                         # unused by forward (API parity)
        self.min_val = jnp.zeros((1,), jnp.float32)              # mirrors register_buffer
        self.max_val = jnp.zeros((1,), jnp.float32)

    def forward(self, x):
        n = int(x.size)
        k = max(int(self.percentile * n), 1)                     # torch.kthvalue requires k >= 1
        min_val_cur, max_val_cur = _min_and_kth_abs(x, k)
        if self.num_flag == 0:
            self.num_flag += 1
            max_val = max_val_cur
            min_val = min_val_cur
        else:
            max_val = (1.0 - self.momentum) * self.max_val + self.momentum * max_val_cur
            min_val = (1.0 - self.momentum) * self.min_val + self.momentum * min_val_cur
        self.max_val = jnp.reshape(max_val, (1,)).astype(jnp.float32)
        self.min_val = jnp.reshape(min_val, (1,)).astype(jnp.float32)
        return None                                              # PyTorch forward returns nothing

    __call__ = forward


if __name__ == "__main__":
    key = jax.random.PRNGKey(0)
    k1, k2, k3, k4 = jax.random.split(key, 4)

    # Small NCHW activations (second call exercises the momentum path), an odd-sized tensor
    # (padding path), and one tensor above 2**20 elements to exercise the HBM streaming path.
    x1 = jax.random.normal(k1, (2, 4, 16, 16), dtype=jnp.float32)
    x2 = 3.0 * jax.random.normal(k2, (2, 4, 16, 16), dtype=jnp.float32) + 0.5
    x3 = jax.random.normal(k3, (3, 5, 7, 11), dtype=jnp.float32)
    x4 = jax.random.normal(k4, (2, 9, 256, 256), dtype=jnp.float32)

    obs = HistogramObserver(out_channels=4, level='L')
    momentum, percentile = obs.momentum, obs.percentile

    # Pure-JAX reference of the PyTorch forward.
    ref_min = jnp.zeros((1,), jnp.float32)
    ref_max = jnp.zeros((1,), jnp.float32)
    ref_flag = 0

    ok = True
    for x in (x1, x2, x3, x4):
        obs.forward(x)
        jax.block_until_ready((obs.min_val, obs.max_val))

        kk = max(int(percentile * x.size), 1)
        max_cur = jnp.sort(jnp.abs(x).reshape(-1))[kk - 1]
        min_cur = jnp.min(x)
        if ref_flag == 0:
            ref_flag = 1
            ref_max = jnp.reshape(max_cur, (1,))
            ref_min = jnp.reshape(min_cur, (1,))
        else:
            ref_max = (1.0 - momentum) * ref_max + momentum * max_cur
            ref_min = (1.0 - momentum) * ref_min + momentum * min_cur

        ok &= bool(jnp.allclose(obs.min_val, ref_min, rtol=1e-6, atol=1e-6))
        ok &= bool(jnp.allclose(obs.max_val, ref_max, rtol=1e-6, atol=1e-6))

    if ok:
        print("KERNEL_OK")
    else:
        raise SystemExit("mismatch vs reference")
</pallas_src>

<mosaic_0001>
module attributes {stable_mosaic.version = 11 : i64} {
  func.func @kernel(%arg0: i32, %arg1: memref<1xi32, #tpu.memory_space<smem>>, %arg2: memref<16x128xf32, #tpu.memory_space<vmem>>, %arg3: memref<1x1xf32, #tpu.memory_space<smem>>, %arg4: memref<1x1xi32, #tpu.memory_space<smem>>, %arg5: memref<16x128xi32, #tpu.memory_space<vmem>>) attributes {dimension_semantics = [#tpu.dimension_semantics<arbitrary>], iteration_bounds = array<i64: 1>, scalar_prefetch = 1 : i64, scratch_operands = 1 : i64, tpu.core_type = #tpu.core_type<tc>, window_params = [{pipeline_mode = #tpu.pipeline_mode<synchronous>, transform_indices = @transform_0, window_bounds = array<i64: 16, 128>}, {transform_indices = @transform_1, window_bounds = array<i64: 1, 1>}, {transform_indices = @transform_2, window_bounds = array<i64: 1, 1>}]} {
    %c0 = arith.constant 0 : index
    %c0_0 = arith.constant 0 : index
    %0 = vector.load %arg2[%c0, %c0_0] : memref<16x128xf32, #tpu.memory_space<vmem>>, vector<16x128xf32>
    %1 = vector.shape_cast %0 : vector<16x128xf32> to vector<1x16x128xf32>
    %cst = arith.constant dense<0x7F800000> : vector<1xf32>
    %2 = vector.multi_reduction <minimumf>, %1, %cst [1, 2] : vector<1x16x128xf32> to vector<1xf32>
    %3 = vector.shape_cast %2 : vector<1xf32> to vector<1x1x1xf32>
    %4 = vector.extract %3[0, 0, 0] : f32 from vector<1x1x1xf32>
    %c0_1 = arith.constant 0 : index
    %c0_2 = arith.constant 0 : index
    %5 = memref.load %arg3[%c0_1, %c0_2] : memref<1x1xf32, #tpu.memory_space<smem>>
    memref.store %4, %arg3[%c0_1, %c0_2] : memref<1x1xf32, #tpu.memory_space<smem>>
    %c0_3 = arith.constant 0 : index
    %c0_4 = arith.constant 0 : index
    %6 = vector.load %arg2[%c0_3, %c0_4] : memref<16x128xf32, #tpu.memory_space<vmem>>, vector<16x128xf32>
    %7 = math.absf %6 : vector<16x128xf32>
    %8 = tpu.bitcast %7 : vector<16x128xf32> -> vector<16x128xi32>
    %c0_5 = arith.constant 0 : index
    %c0_6 = arith.constant 0 : index
    %9 = vector.load %arg5[%c0_5, %c0_6] : memref<16x128xi32, #tpu.memory_space<vmem>>, vector<16x128xi32>
    tpu.vector_store %arg5[%c0_5, %c0_6], %8 {strides = array<i32>} : memref<16x128xi32, #tpu.memory_space<vmem>>, vector<16x128xi32>,
    %c0_7 = arith.constant 0 : index
    %10 = memref.load %arg1[%c0_7] : memref<1xi32, #tpu.memory_space<smem>>
    %c0_i32 = arith.constant 0 : i32
    %c0_i32_8 = arith.constant 0 : i32
    %c31_i32 = arith.constant 31 : i32
    %11 = arith.addi %c0_i32_8, %c31_i32 : i32
    %c1_i32 = arith.constant 1 : i32
    %12 = scf.for %arg6 = %c0_i32_8 to %11 step %c1_i32 iter_args(%arg7 = %c0_i32) -> (i32)  : i32 {
      %c30_i32 = arith.constant 30 : i32
      %14 = arith.subi %c30_i32, %arg6 : i32
      %c1_i32_12 = arith.constant 1 : i32
      %15 = arith.shli %c1_i32_12, %14 : i32
      %c1_i32_13 = arith.constant 1 : i32
      %16 = arith.subi %15, %c1_i32_13 : i32
      %17 = arith.ori %arg7, %16 : i32
      %c0_14 = arith.constant 0 : index
      %c0_15 = arith.constant 0 : index
      %18 = vector.load %arg5[%c0_14, %c0_15] : memref<16x128xi32, #tpu.memory_space<vmem>>, vector<16x128xi32>
      %19 = vector.broadcast %17 : i32 to vector<16x128xi32>
      %20 = arith.cmpi sle, %18, %19 : vector<16x128xi32>
      %21 = arith.extui %20 : vector<16x128xi1> to vector<16x128xi32>
      %22 = vector.shape_cast %21 : vector<16x128xi32> to vector<1x16x128xi32>
      %cst_16 = arith.constant dense<0> : vector<1xi32>
      %23 = vector.multi_reduction <add>, %22, %cst_16 [1, 2] : vector<1x16x128xi32> to vector<1xi32>
      %24 = vector.shape_cast %23 : vector<1xi32> to vector<1x1x1xi32>
      %25 = vector.extract %24[0, 0, 0] : i32 from vector<1x1x1xi32>
      %26 = arith.cmpi sge, %25, %10 : i32
      %c1_i32_17 = arith.constant 1 : i32
      %27 = arith.shli %c1_i32_17, %14 : i32
      %28 = arith.ori %arg7, %27 : i32
      %29 = arith.select %26, %arg7, %28 : i32
      scf.yield %29 : i32
    }
    %c31_i32_9 = arith.constant 31 : i32
    %c0_10 = arith.constant 0 : index
    %c0_11 = arith.constant 0 : index
    %13 = memref.load %arg4[%c0_10, %c0_11] : memref<1x1xi32, #tpu.memory_space<smem>>
    memref.store %12, %arg4[%c0_10, %c0_11] : memref<1x1xi32, #tpu.memory_space<smem>>
    return
  }
  func.func @transform_0(%arg0: i32, %arg1: memref<1xi32, #tpu.memory_space<smem>>) -> (i32, i32) {
    %c0_i32 = arith.constant 0 : i32
    %c0_i32_0 = arith.constant 0 : i32
    %c0_i32_1 = arith.constant 0 : i32
    return %c0_i32, %c0_i32_0 : i32, i32
  }
  func.func @transform_1(%arg0: i32, %arg1: memref<1xi32, #tpu.memory_space<smem>>) -> (i32, i32) {
    %c0_i32 = arith.constant 0 : i32
    %c0_i32_0 = arith.constant 0 : i32
    %c0_i32_1 = arith.constant 0 : i32
    return %c0_i32, %c0_i32_0 : i32, i32
  }
  func.func @transform_2(%arg0: i32, %arg1: memref<1xi32, #tpu.memory_space<smem>>) -> (i32, i32) {
    %c0_i32 = arith.constant 0 : i32
    %c0_i32_0 = arith.constant 0 : i32
    %c0_i32_1 = arith.constant 0 : i32
    return %c0_i32, %c0_i32_0 : i32, i32
  }
}

</mosaic_0001>

<llo_original>
// kernel: _min_and_kth_abs.1
$region0: #{_min_and_kth_abs.1}
  #allocation0 [shape = 'u32[]', space=smem, size = 0x4, offset = 0x4, fixed_abs, tag = 'smem constant byte address 0x4 - core index']
  #allocation1 [shape = 'u32[144,128]{1,0:T(1,128)}', space=vmem, size = 0x12000, scoped, tag = 'internal scratch']
  #allocation2 [shape = 's32[16,128]{1,0:T(8,128)}', space=vmem, size = 0x2000, scoped, tag = 'scratch operand']
  #allocation3 [shape = 's32[1]{0}', space=sflag, size = 0x4, scoped, tag = 'scoped memory for _min_and_kth_abs.1']
  #allocation4 [shape = 's32[1]{0:T(128)S(6)}', space=smem, size = 0x200, scoped, tag = 'prefetched SMEM operand 0']
  %s0 = inlined_call_operand.<no memory space> [shape: s32[1], index: 0, kind: input, shape index: {}]
  %s1 = inlined_call_operand.vmem [shape: f32[16,128], index: 1, kind: input, shape index: {}]
  %s2 = inlined_call_operand.hbm [shape: f32[1,1], index: 2, kind: output, shape index: {0}]
  %s3 = inlined_call_operand.hbm [shape: s32[1,1], index: 3, kind: output, shape index: {1}]
  %4 = xla_tuple %s2, %s3
  %s5 = sld [smem:[#allocation0]]
  $region29: #{_min_and_kth_abs.1} parent=0
    _
  %s7 = ssub.s32 1, %s5
  %s8 = scalar_select 0, %s7, %s5
  %9 = sst [smem:[#allocation4]] %s0
  $region1: #{_min_and_kth_abs.1} parent=0
    #allocation5 [shape = 'u8[512]{0}', space=smem, size = 0x200, scoped, tag = 'output window, operand 0, single buffered']
    #allocation6 [shape = 's32[1]{0}', space=sflag, size = 0x4, scoped, tag = 'scoped memory for _min_and_kth_abs.1']
    #allocation7 [shape = 'u8[512]{0}', space=smem, size = 0x200, scoped, tag = 'output window, operand 1, single buffered']
    #allocation8 [shape = 's32[1]{0}', space=sflag, size = 0x4, scoped, tag = 'scoped memory for _min_and_kth_abs.1']
    %10 = vsyncpa [#allocation6], 0
    %11 = vsyncpa [#allocation8], 0
    // Predicated region
    $region2: #{_min_and_kth_abs.1} parent=1 // pred_check
      _
    $region3: #{_min_and_kth_abs.1} parent=1 // pred_check_branch
      %13 = sbr.rel (0) target = $region5
    $region4: #{_min_and_kth_abs.1} parent=1 // pred_region
      _
    $region5: #{_min_and_kth_abs.1} parent=1 // pred_fallthru
      _
    %v14 = vld [vmem:[%s1] sm:$0xff]
    %v15 = vld [vmem:[%s1 + $0x8] sm:$0xff]
    %v16 = vmin.f32 %v14, %v15
    %17 = vmin.xlane.f32.xlu0 %v16
    %v18 = vpop.xlane.xlu0 %17
    %v19 = vrot.slane %v18, 4
    %v20 = vmin.f32 %v18, %v19
    %v21 = vrot.slane %v20, 2
    %v22 = vmin.f32 %v20, %v21
    %v23 = vrot.slane %v22, 1
    %v24 = vmin.f32 %v22, %v23
    %s25 = vtos %v24
    %s26 = scalar_lea.smem [#allocation5], 0
    %27 = sst [smem:[%s26]] %s25
    %v28 = vld [vmem:[%s1] sm:$0xff]
    %v29 = vld [vmem:[%s1 + $0x8] sm:$0xff]
    %v30 = vand.u32 2147483647, %v28
    %v31 = vand.u32 2147483647, %v29
    %34 = vst [vmem:[#allocation2] sm:$0xff] %v30
    %35 = vst [vmem:[#allocation2 + $0x8] sm:$0xff] %v31
    %s36 = sld [smem:[#allocation4]]
    loop: start=0, step=1, limit=31
    $region6: #{_min_and_kth_abs.1} parent=1 // loop_pre_header
      _
    $region7: #{_min_and_kth_abs.1} parent=1 // loop_header
      %s38 = sphi 0, %s42
      %p39 = scmp.ge.s32.totalorder %s38, 31
      %s43 = sphi 0, %s77
    $region8: #{_min_and_kth_abs.1} parent=1 // loop_header_branch
      %41 = sbr.rel (%p39) target = $region12
    $region9: #{_min_and_kth_abs.1} parent=1 // loop_body
      %s44 = ssub.s32 30, %s38
      %s45 = sshll.u32 1, %s44
      %s46 = ssub.s32 %s45, 1
      %s47 = sor.u32 %s43, %s46
      %v48 = vld [vmem:[#allocation2] sm:$0xff]
      %v49 = vld [vmem:[#allocation2 + $0x8] sm:$0xff]
      %v50 = vstv %s47
      %vm51 = vcmp.le.s32.totalorder %v48, %v50
      %vm52 = vcmp.le.s32.totalorder %v49, %v50
      %v53 = vsel %vm51, 1, 0
      %v54 = vsel %vm52, 1, 0
      %v55 = vadd.s32 %v53, %v54
      %v56 = vand.u32 %v55, 65535
      %v57 = vshrl.u32 %v55, 16
      %v58 = vcvt.s32.f32 %v56
      %v59 = vcvt.s32.f32 %v57
      %60 = vadd.xlane.f32.xlu0 %v58
      %v61 = vpop.xlane.xlu0 %60
      %62 = vadd.xlane.f32.xlu0 %v59
      %v63 = vpop.xlane.xlu0 %62
      %v64 = vcvt.f32.s32 %v61
      %v65 = vcvt.f32.s32 %v63
      %v66 = vshll.u32 %v65, 16
      %v67 = vadd.s32 %v66, %v64
      %v68 = vrot.slane %v67, 4
      %v69 = vadd.s32 %v67, %v68
      %v70 = vrot.slane %v69, 2
      %v71 = vadd.s32 %v69, %v70
      %v72 = vrot.slane %v71, 1
      %v73 = vadd.s32 %v71, %v72
      %s74 = vtos %v73
      %p75 = scmp.ge.s32.totalorder %s74, %s36
      %s76 = sor.u32 %s43, %s45
      %s77 = scalar_select %p75, %s43, %s76
    $region10: #{_min_and_kth_abs.1} parent=1 // loop_footer
      %s42 = sadd.s32 1, %s38
    $region11: #{_min_and_kth_abs.1} parent=1 // loop_footer_branch
      %37 = sbr.rel target = $region7
    $region12: #{_min_and_kth_abs.1} parent=1 // loop_exit
      _
    %s78 = scalar_lea.smem [#allocation7], 0
    %79 = sst [smem:[%s78]] %s43
    // Predicated region
    $region13: #{_min_and_kth_abs.1} parent=1 // pred_check
      _
    $region14: #{_min_and_kth_abs.1} parent=1 // pred_check_branch
      %81 = sbr.rel (0) target = $region16
    $region15: #{_min_and_kth_abs.1} parent=1 // pred_region
      %s83 = ssub.s32 16, 16
      %84 = vsyncadd [#allocation6], %s83
      %87 = dma.smem_to_hbm [#allocation5], 16, %s2, [#allocation6]
    $region16: #{_min_and_kth_abs.1} parent=1 // pred_fallthru
      _
    // Predicated region
    $region17: #{_min_and_kth_abs.1} parent=1 // pred_check
      _
    $region18: #{_min_and_kth_abs.1} parent=1 // pred_check_branch
      %89 = sbr.rel (0) target = $region20
    $region19: #{_min_and_kth_abs.1} parent=1 // pred_region
      %s91 = ssub.s32 16, 16
      %92 = vsyncadd [#allocation8], %s91
      %95 = dma.smem_to_hbm [#allocation7], 16, %s3, [#allocation8]
    $region20: #{_min_and_kth_abs.1} parent=1 // pred_fallthru
      _
    // Predicated region
    $region21: #{_min_and_kth_abs.1} parent=1 // pred_check
      _
    $region22: #{_min_and_kth_abs.1} parent=1 // pred_check_branch
      %97 = sbr.rel (0) target = $region24
    $region23: #{_min_and_kth_abs.1} parent=1 // pred_region
      %98 = dma.done [#allocation6], 16
    $region24: #{_min_and_kth_abs.1} parent=1 // pred_fallthru
      _
    // Predicated region
    $region25: #{_min_and_kth_abs.1} parent=1 // pred_check
      _
    $region26: #{_min_and_kth_abs.1} parent=1 // pred_check_branch
      %100 = sbr.rel (0) target = $region28
    $region27: #{_min_and_kth_abs.1} parent=1 // pred_region
      %101 = dma.done [#allocation8], 16
    $region28: #{_min_and_kth_abs.1} parent=1 // pred_fallthru
      _
    %102 = sfence
    %103 = vsyncpa [#allocation6], 1
    %104 = vsyncpa [#allocation8], 1

</llo_original>
